<compile_context>
chip_gen: v6e
topology: v6e:2x2x1
jax: 0.10.0
libtpu: 0.0.40
codegen_flags: <defaults>
</compile_context>

<pallas_src>
import functools

import jax
import jax.numpy as jnp
from jax import lax
from jax.experimental import pallas as pl
from jax.experimental.pallas import tpu as pltpu

_LANE = 128
_SUBLANE = 8


def _round_up(x, m):
    return ((x + m - 1) // m) * m


def _fused_actor_critic_kernel(n_layers, action_dim, x_ref, *refs):
    """refs = (w1, b1, ..., wL, bL, w_head, b_head, o_ref).

    h   = relu(...relu(x @ W1 + b1)...)          # bf16 MXU, f32 accumulate
    out = h @ W_head + b_head                    # cols [0:A]=logits, col A=value, rest 0
    Fused epilogue: masked log_softmax over the first A lanes + entropy, packed into one
    lane-dense slab: cols [0:A]=log_probs, col A=value, col A+1=entropy.
    """
    o_ref = refs[-1]
    compute_dtype = refs[0].dtype                      # weight dtype (bf16 by default)

    h = x_ref[...].astype(compute_dtype)
    idx = 0
    for _ in range(n_layers):
        w = refs[idx][...]                             # (Din, Dout) bf16
        b = refs[idx + 1][...]                         # (1, Dout) f32, broadcasts
        idx += 2
        h = jnp.maximum(
            jnp.dot(h, w, preferred_element_type=jnp.float32) + b, 0.0
        ).astype(compute_dtype)

    w_head = refs[idx][...]
    b_head = refs[idx + 1][...]
    out = jnp.dot(h, w_head, preferred_element_type=jnp.float32) + b_head  # (rows, P) f32

    # ---- fused Categorical epilogue (EUP/XLU work, ~free under the MXU) ----
    lane = lax.broadcasted_iota(jnp.int32, out.shape, dimension=1)
    a_mask = lane < action_dim
    m = jnp.max(jnp.where(a_mask, out, -jnp.inf), axis=-1, keepdims=True)
    p = jnp.where(a_mask, jnp.exp(out - m), 0.0)
    s = jnp.sum(p, axis=-1, keepdims=True)
    log_s = jnp.log(s)
    log_probs = out - m - log_s                        # valid on the first A lanes only
    ent = log_s - jnp.sum(p * (out - m), axis=-1, keepdims=True) / s
    v = jnp.sum(jnp.where(lane == action_dim, out, 0.0), axis=-1, keepdims=True)

    slab = jnp.where(a_mask, log_probs,
                     jnp.where(lane == action_dim, v,
                               jnp.where(lane == action_dim + 1, ent, 0.0)))
    o_ref[...] = slab.astype(o_ref.dtype)


def fused_actor_critic_forward(x, packed_params, out_pad, action_dim, *,
                               out_dtype=jnp.bfloat16, tile_m=2048):
    """Run the fused body+heads+epilogue kernel. Returns a (B, out_pad) lane-dense slab."""
    B, D = x.shape
    n_layers = len(packed_params) // 2 - 1
    kernel = functools.partial(_fused_actor_critic_kernel, n_layers, action_dim)

    flops = 0
    for w in packed_params[0::2]:
        flops += 2 * B * w.shape[0] * w.shape[1]
    bytes_accessed = (
        x.size * x.dtype.itemsize
        + sum(int(p.size) * p.dtype.itemsize for p in packed_params)
        + B * out_pad * jnp.dtype(out_dtype).itemsize)
    cost = pl.CostEstimate(flops=flops, transcendentals=B * (out_pad + 2),
                           bytes_accessed=bytes_accessed)

    out_shape = jax.ShapeDtypeStruct((B, out_pad), out_dtype)

    if B <= tile_m:
        # RL-typical small batch: one full-extent block per array, no grid scaffolding.
        return pl.pallas_call(kernel, out_shape=out_shape, cost_estimate=cost)(
            x, *packed_params)

    # Large batch: tile over batch (weights resident as full-extent blocks).  pl.cdiv
    # grid + Pallas boundary masking: no wrapper-side jnp.pad / output slice copies.
    grid = (pl.cdiv(B, tile_m),)
    in_specs = [pl.BlockSpec((tile_m, D), lambda i: (i, 0))]
    for p in packed_params:
        in_specs.append(pl.BlockSpec(p.shape, lambda i: (0, 0)))
    # TODO(synk): on v7x, verify "parallel" actually shards the batch grid across the
    # 2 TensorCores; if not, switch this axis to pltpu.CORE_PARALLEL (no-op on v5e/v6e).
    return pl.pallas_call(
        kernel,
        out_shape=out_shape,
        grid=grid,
        in_specs=in_specs,
        out_specs=pl.BlockSpec((tile_m, out_pad), lambda i: (i, 0)),
        compiler_params=pltpu.CompilerParams(dimension_semantics=("parallel",)),
        cost_estimate=cost,
    )(x, *packed_params)


def orthogonal_init(key, d_in, d_out, w_scale=1.0, dtype=jnp.float32):
    """Matches nn.init.orthogonal_ on a PyTorch (out, in) weight, returned as (in, out)."""
    a = jax.random.normal(key, (d_out, d_in), dtype=jnp.float32)
    if d_out < d_in:
        q, r = jnp.linalg.qr(a.T)           # q: (d_in, d_out)
        q = q * jnp.sign(jnp.diag(r))
        w = q.T                             # (d_out, d_in), orthonormal rows
    else:
        q, r = jnp.linalg.qr(a)             # q: (d_out, d_in)
        q = q * jnp.sign(jnp.diag(r))
        w = q
    w = (w * w_scale).astype(dtype)
    return w.T                              # (d_in, d_out) layout used by the kernel


class CategoricalActorCriticNetPallas:
    """JAX/Pallas port of CategoricalActorCriticNet.

    hidden_units=() reproduces the spec's default (DummyBody bodies): heads act on obs.
    hidden_units=(64, 64) reproduces the usual a2c-shang usage with FCBody(state_dim).
    """

    def __init__(self, state_dim, action_dim, hidden_units=(64, 64), key=None,
                 param_dtype=jnp.bfloat16, out_dtype=jnp.bfloat16, tile_m=2048):
        if key is None:
            key = jax.random.PRNGKey(0)
        self.state_dim = state_dim
        self.action_dim = action_dim
        self.hidden_units = tuple(hidden_units)
        self.out_dtype = out_dtype
        self.tile_m = tile_m

        # ---- f32 master parameters (PyTorch-equivalent init) ----
        dims = (state_dim,) + self.hidden_units
        body_params = []
        for d_in, d_out in zip(dims[:-1], dims[1:]):
            key, sub = jax.random.split(key)
            w = orthogonal_init(sub, d_in, d_out, w_scale=1.0)
            b = jnp.zeros((d_out,), dtype=jnp.float32)
            body_params.append((w, b))
        feat = dims[-1]
        key, ka, kc = jax.random.split(key, 3)
        w_a = orthogonal_init(ka, feat, action_dim, w_scale=1e-3)
        b_a = jnp.zeros((action_dim,), dtype=jnp.float32)
        w_c = orthogonal_init(kc, feat, 1, w_scale=1e-3)
        b_c = jnp.zeros((1,), dtype=jnp.float32)
        self.body_params = body_params
        self.head_params = (w_a, b_a, w_c, b_c)

        # ---- zero-pad & pack for the fused lane-dense kernel ----
        # Hidden widths padded to 128 lanes (zero rows/cols + ReLU(0)=0 keep it exact).
        # Head packed as one slab: cols [0:A]=fc_action, col A=fc_critic, col A+1 is the
        # (computed) entropy column, rest zero.  Weights in bf16, biases in f32.
        self.out_pad = _round_up(max(action_dim + 2, _LANE), _LANE)
        packed = []
        in_dim = state_dim
        for w, b in body_params:
            d_in, d_out = w.shape
            d_out_p = _round_up(max(d_out, _LANE), _LANE)
            wp = jnp.zeros((in_dim, d_out_p), jnp.float32).at[:d_in, :d_out].set(w)
            bp = jnp.zeros((1, d_out_p), jnp.float32).at[0, :d_out].set(b)
            packed += [wp.astype(param_dtype), bp]
            in_dim = d_out_p
        wh = jnp.zeros((in_dim, self.out_pad), jnp.float32)
        wh = wh.at[:feat, :action_dim].set(w_a)
        wh = wh.at[:feat, action_dim].set(w_c[:, 0])
        bh = jnp.zeros((1, self.out_pad), jnp.float32)
        bh = bh.at[0, :action_dim].set(b_a)
        bh = bh.at[0, action_dim].set(b_c[0])
        packed += [wh.astype(param_dtype), bh]
        self.packed_params = packed

    # Fused Pallas forward: one (B, out_pad) slab with log_probs | value | entropy.
    def forward_slab(self, obs):
        return fused_actor_critic_forward(obs, self.packed_params, self.out_pad,
                                          self.action_dim, out_dtype=self.out_dtype,
                                          tile_m=self.tile_m)

    def log_probs_value_entropy(self, obs):
        slab = self.forward_slab(obs)
        A = self.action_dim
        log_probs = slab[:, :A].astype(jnp.float32)
        v = slab[:, A:A + 1].astype(jnp.float32)
        ent = slab[:, A + 1:A + 2].astype(jnp.float32)
        return log_probs, v, ent

    def __call__(self, obs, key=None, action=None):
        log_probs, v, ent = self.log_probs_value_entropy(obs)
        if action is None:
            if key is None:
                raise ValueError("key is required when sampling an action")
            # TODO(synk): sampling could also be fused in-kernel via pltpu.prng_seed /
            # prng_random_bits (Gumbel trick); kept in JAX for exact jax.random parity
            # and to support the `action=` argument of the original module.
            action = jax.random.categorical(key, log_probs, axis=-1)
        log_pi_a = jnp.take_along_axis(log_probs, action[:, None], axis=-1)
        return {"a": action, "log_pi_a": log_pi_a, "ent": ent, "v": v}

    # Pure-JAX f32 reference (unpadded master params) matching the PyTorch module.
    def reference_forward(self, obs):
        h = obs
        for w, b in self.body_params:
            h = jnp.maximum(h @ w + b, 0.0)
        w_a, b_a, w_c, b_c = self.head_params
        logits = h @ w_a + b_a
        v = h @ w_c + b_c
        log_probs = jax.nn.log_softmax(logits, axis=-1)
        ent = -jnp.sum(jnp.exp(log_probs) * log_probs, axis=-1, keepdims=True)
        return log_probs, v, ent


if __name__ == "__main__":
    key = jax.random.PRNGKey(0)
    k_x, k_net, k_net0, k_sample, k_big = jax.random.split(key, 5)

    batch, state_dim, action_dim = 8, 32, 6
    x = jax.random.normal(k_x, (batch, state_dim), dtype=jnp.float32)

    # --- usual a2c-shang configuration: phi_body = FCBody(state_dim, (64, 64)) ---
    net = CategoricalActorCriticNetPallas(state_dim, action_dim,
                                          hidden_units=(64, 64), key=k_net)
    out = net(x, key=k_sample)
    jax.block_until_ready(out["v"])

    lp, v, ent = net.log_probs_value_entropy(x)
    lp_ref, v_ref, ent_ref = net.reference_forward(x)
    # bf16 params + bf16 output slab -> relaxed tolerances vs. the f32 reference.
    assert jnp.allclose(lp, lp_ref, atol=3e-2), float(jnp.max(jnp.abs(lp - lp_ref)))
    assert jnp.allclose(v, v_ref, atol=5e-4), float(jnp.max(jnp.abs(v - v_ref)))
    assert jnp.allclose(ent, ent_ref, atol=3e-2), float(jnp.max(jnp.abs(ent - ent_ref)))

    log_pi_ref = jnp.take_along_axis(lp_ref, out["a"][:, None], axis=-1)
    assert out["a"].shape == (batch,)
    assert out["log_pi_a"].shape == (batch, 1)
    assert out["ent"].shape == (batch, 1)
    assert out["v"].shape == (batch, 1)
    assert jnp.allclose(out["log_pi_a"], log_pi_ref, atol=3e-2)

    # --- spec's default configuration: DummyBody bodies (heads straight on obs) ---
    net0 = CategoricalActorCriticNetPallas(state_dim, action_dim,
                                           hidden_units=(), key=k_net0)
    out0 = net0(x, key=k_sample)
    jax.block_until_ready(out0["v"])
    lp0, v0, ent0 = net0.log_probs_value_entropy(x)
    lp0_ref, v0_ref, ent0_ref = net0.reference_forward(x)
    assert jnp.allclose(lp0, lp0_ref, atol=3e-2)
    assert jnp.allclose(v0, v0_ref, atol=5e-4)
    assert jnp.allclose(ent0, ent0_ref, atol=3e-2)

    # --- exercise the large-batch grid path with a small tile_m (keeps shapes small),
    #     both tile-divisible and non-divisible B (no wrapper pad / slice copies) ---
    net_big = CategoricalActorCriticNetPallas(state_dim, action_dim,
                                              hidden_units=(64, 64), key=k_net,
                                              tile_m=16)
    for big_b in (48, 40):
        xb = jax.random.normal(k_big, (big_b, state_dim), dtype=jnp.float32)
        lpb, vb, entb = net_big.log_probs_value_entropy(xb)
        lpb_ref, vb_ref, entb_ref = net_big.reference_forward(xb)
        assert lpb.shape == (big_b, action_dim)
        assert jnp.allclose(lpb, lpb_ref, atol=3e-2)
        assert jnp.allclose(vb, vb_ref, atol=5e-4)
        assert jnp.allclose(entb, entb_ref, atol=3e-2)
    jax.block_until_ready(lpb)

    print("KERNEL_OK")
</pallas_src>

<mosaic_0001>
module attributes {stable_mosaic.version = 11 : i64} {
  func.func @_fused_actor_critic_kernel(%arg0: memref<8x32xf32, #tpu.memory_space<vmem>>, %arg1: memref<32x128xbf16, #tpu.memory_space<vmem>>, %arg2: memref<1x128xf32, #tpu.memory_space<vmem>>, %arg3: memref<128x128xbf16, #tpu.memory_space<vmem>>, %arg4: memref<1x128xf32, #tpu.memory_space<vmem>>, %arg5: memref<128x128xbf16, #tpu.memory_space<vmem>>, %arg6: memref<1x128xf32, #tpu.memory_space<vmem>>, %arg7: memref<8x128xbf16, #tpu.memory_space<vmem>>) attributes {dimension_semantics = [], scalar_prefetch = 0 : i64, scratch_operands = 0 : i64, tpu.core_type = #tpu.core_type<tc>} {
    %c0 = arith.constant 0 : index
    %c0_0 = arith.constant 0 : index
    %0 = vector.load %arg0[%c0, %c0_0] : memref<8x32xf32, #tpu.memory_space<vmem>>, vector<8x32xf32>
    %1 = arith.truncf %0 : vector<8x32xf32> to vector<8x32xbf16>
    %c0_1 = arith.constant 0 : index
    %c0_2 = arith.constant 0 : index
    %2 = vector.load %arg1[%c0_1, %c0_2] : memref<32x128xbf16, #tpu.memory_space<vmem>>, vector<32x128xbf16>
    %c0_3 = arith.constant 0 : index
    %c0_4 = arith.constant 0 : index
    %3 = vector.load %arg2[%c0_3, %c0_4] : memref<1x128xf32, #tpu.memory_space<vmem>>, vector<1x128xf32>
    %cst = arith.constant dense<0.000000e+00> : vector<8x128xf32>
    %4 = tpu.matmul %1, %2, %cst {dimension_numbers = #tpu.dot_dimension_numbers<[1], [0], [0], [1], [0, 0, 1, 1], [], []>} : vector<8x32xbf16>, vector<32x128xbf16>, vector<8x128xf32> -> vector<8x128xf32>
    %5 = vector.broadcast %3 : vector<1x128xf32> to vector<8x128xf32>
    %6 = arith.addf %4, %5 : vector<8x128xf32>
    %cst_5 = arith.constant 0.000000e+00 : f32
    %7 = vector.broadcast %cst_5 : f32 to vector<8x128xf32>
    %8 = arith.maximumf %6, %7 : vector<8x128xf32>
    %9 = arith.truncf %8 : vector<8x128xf32> to vector<8x128xbf16>
    %c0_6 = arith.constant 0 : index
    %c0_7 = arith.constant 0 : index
    %10 = vector.load %arg3[%c0_6, %c0_7] : memref<128x128xbf16, #tpu.memory_space<vmem>>, vector<128x128xbf16>
    %c0_8 = arith.constant 0 : index
    %c0_9 = arith.constant 0 : index
    %11 = vector.load %arg4[%c0_8, %c0_9] : memref<1x128xf32, #tpu.memory_space<vmem>>, vector<1x128xf32>
    %cst_10 = arith.constant dense<0.000000e+00> : vector<8x128xf32>
    %12 = tpu.matmul %9, %10, %cst_10 {dimension_numbers = #tpu.dot_dimension_numbers<[1], [0], [0], [1], [0, 0, 1, 1], [], []>} : vector<8x128xbf16>, vector<128x128xbf16>, vector<8x128xf32> -> vector<8x128xf32>
    %13 = vector.broadcast %11 : vector<1x128xf32> to vector<8x128xf32>
    %14 = arith.addf %12, %13 : vector<8x128xf32>
    %cst_11 = arith.constant 0.000000e+00 : f32
    %15 = vector.broadcast %cst_11 : f32 to vector<8x128xf32>
    %16 = arith.maximumf %14, %15 : vector<8x128xf32>
    %17 = arith.truncf %16 : vector<8x128xf32> to vector<8x128xbf16>
    %c0_12 = arith.constant 0 : index
    %c0_13 = arith.constant 0 : index
    %18 = vector.load %arg5[%c0_12, %c0_13] : memref<128x128xbf16, #tpu.memory_space<vmem>>, vector<128x128xbf16>
    %c0_14 = arith.constant 0 : index
    %c0_15 = arith.constant 0 : index
    %19 = vector.load %arg6[%c0_14, %c0_15] : memref<1x128xf32, #tpu.memory_space<vmem>>, vector<1x128xf32>
    %cst_16 = arith.constant dense<0.000000e+00> : vector<8x128xf32>
    %20 = tpu.matmul %17, %18, %cst_16 {dimension_numbers = #tpu.dot_dimension_numbers<[1], [0], [0], [1], [0, 0, 1, 1], [], []>} : vector<8x128xbf16>, vector<128x128xbf16>, vector<8x128xf32> -> vector<8x128xf32>
    %21 = vector.broadcast %19 : vector<1x128xf32> to vector<8x128xf32>
    %22 = arith.addf %20, %21 : vector<8x128xf32>
    %23 = tpu.iota {dimensions = array<i32: 1>} : vector<8x128xi32>
    %c6_i32 = arith.constant 6 : i32
    %24 = vector.broadcast %c6_i32 : i32 to vector<8x128xi32>
    %25 = arith.cmpi slt, %23, %24 : vector<8x128xi32>
    %cst_17 = arith.constant 0xFF800000 : f32
    %26 = vector.broadcast %cst_17 : f32 to vector<8x128xf32>
    %27 = arith.select %25, %22, %26 : vector<8x128xi1>, vector<8x128xf32>
    %cst_18 = arith.constant dense<0xFF800000> : vector<8xf32>
    %28 = vector.multi_reduction <maximumf>, %27, %cst_18 [1] : vector<8x128xf32> to vector<8xf32>
    %29 = vector.shape_cast %28 : vector<8xf32> to vector<8x1xf32>
    %30 = vector.broadcast %29 : vector<8x1xf32> to vector<8x128xf32>
    %31 = arith.subf %22, %30 : vector<8x128xf32>
    %32 = math.exp %31 : vector<8x128xf32>
    %cst_19 = arith.constant 0.000000e+00 : f32
    %33 = vector.broadcast %cst_19 : f32 to vector<8x128xf32>
    %34 = arith.select %25, %32, %33 : vector<8x128xi1>, vector<8x128xf32>
    %cst_20 = arith.constant dense<0.000000e+00> : vector<8xf32>
    %35 = vector.multi_reduction <add>, %34, %cst_20 [1] : vector<8x128xf32> to vector<8xf32>
    %36 = vector.shape_cast %35 : vector<8xf32> to vector<8x1xf32>
    %37 = math.log %36 : vector<8x1xf32>
    %38 = vector.broadcast %29 : vector<8x1xf32> to vector<8x128xf32>
    %39 = arith.subf %22, %38 : vector<8x128xf32>
    %40 = vector.broadcast %37 : vector<8x1xf32> to vector<8x128xf32>
    %41 = arith.subf %39, %40 : vector<8x128xf32>
    %42 = vector.broadcast %29 : vector<8x1xf32> to vector<8x128xf32>
    %43 = arith.subf %22, %42 : vector<8x128xf32>
    %44 = arith.mulf %34, %43 : vector<8x128xf32>
    %cst_21 = arith.constant dense<0.000000e+00> : vector<8xf32>
    %45 = vector.multi_reduction <add>, %44, %cst_21 [1] : vector<8x128xf32> to vector<8xf32>
    %46 = vector.shape_cast %45 : vector<8xf32> to vector<8x1xf32>
    %47 = arith.divf %46, %36 : vector<8x1xf32>
    %48 = arith.subf %37, %47 : vector<8x1xf32>
    %c6_i32_22 = arith.constant 6 : i32
    %49 = vector.broadcast %c6_i32_22 : i32 to vector<8x128xi32>
    %50 = arith.cmpi eq, %23, %49 : vector<8x128xi32>
    %cst_23 = arith.constant 0.000000e+00 : f32
    %51 = vector.broadcast %cst_23 : f32 to vector<8x128xf32>
    %52 = arith.select %50, %22, %51 : vector<8x128xi1>, vector<8x128xf32>
    %cst_24 = arith.constant dense<0.000000e+00> : vector<8xf32>
    %53 = vector.multi_reduction <add>, %52, %cst_24 [1] : vector<8x128xf32> to vector<8xf32>
    %54 = vector.shape_cast %53 : vector<8xf32> to vector<8x1xf32>
    %c6_i32_25 = arith.constant 6 : i32
    %55 = vector.broadcast %c6_i32_25 : i32 to vector<8x128xi32>
    %56 = arith.cmpi eq, %23, %55 : vector<8x128xi32>
    %c7_i32 = arith.constant 7 : i32
    %57 = vector.broadcast %c7_i32 : i32 to vector<8x128xi32>
    %58 = arith.cmpi eq, %23, %57 : vector<8x128xi32>
    %cst_26 = arith.constant 0.000000e+00 : f32
    %59 = vector.shape_cast %48 : vector<8x1xf32> to vector<8x1xf32>
    %60 = vector.broadcast %59 : vector<8x1xf32> to vector<8x128xf32>
    %61 = vector.broadcast %cst_26 : f32 to vector<8x128xf32>
    %62 = arith.select %58, %60, %61 : vector<8x128xi1>, vector<8x128xf32>
    %63 = vector.shape_cast %54 : vector<8x1xf32> to vector<8x1xf32>
    %64 = vector.broadcast %63 : vector<8x1xf32> to vector<8x128xf32>
    %65 = arith.select %56, %64, %62 : vector<8x128xi1>, vector<8x128xf32>
    %66 = arith.select %25, %41, %65 : vector<8x128xi1>, vector<8x128xf32>
    %67 = arith.truncf %66 : vector<8x128xf32> to vector<8x128xbf16>
    %c0_27 = arith.constant 0 : index
    %c0_28 = arith.constant 0 : index
    %68 = vector.load %arg7[%c0_27, %c0_28] : memref<8x128xbf16, #tpu.memory_space<vmem>>, vector<8x128xbf16>
    tpu.vector_store %arg7[%c0_27, %c0_28], %67 {strides = array<i32>} : memref<8x128xbf16, #tpu.memory_space<vmem>>, vector<8x128xbf16>,
    return
  }
}

</mosaic_0001>

<llo_original>
// kernel: tpu_custom_call.1
$region0: #{tpu_custom_call.1}
  #allocation0 [shape = 'u32[]', space=smem, size = 0x4, offset = 0x4, fixed_abs, tag = 'smem constant byte address 0x4 - core index']
  #allocation1 [shape = 'u32[144,128]{1,0:T(1,128)}', space=vmem, size = 0x12000, scoped, tag = 'internal scratch']
  %s0 = inlined_call_operand.hbm [shape: f32[8,32], index: 0, kind: input, shape index: {}]
  %s1 = inlined_call_operand.hbm [shape: bf16[32,128], index: 1, kind: input, shape index: {}]
  %s2 = inlined_call_operand.vmem [shape: f32[1,128], index: 2, kind: input, shape index: {}]
  %s3 = inlined_call_operand.hbm [shape: bf16[128,128], index: 3, kind: input, shape index: {}]
  %s4 = inlined_call_operand.vmem [shape: f32[1,128], index: 4, kind: input, shape index: {}]
  %s5 = inlined_call_operand.hbm [shape: bf16[128,128], index: 5, kind: input, shape index: {}]
  %s6 = inlined_call_operand.vmem [shape: f32[1,128], index: 6, kind: input, shape index: {}]
  %s7 = inlined_call_operand.hbm [shape: bf16[8,128], index: 7, kind: output, shape index: {}]
  %s8 = sld [smem:[#allocation0]]
  $region54: #{tpu_custom_call.1} parent=0
    _
  %s10 = ssub.s32 1, %s8
  %s11 = scalar_select 0, %s10, %s8
  $region1: #{tpu_custom_call.1} parent=0
    #allocation2 [shape = 'u8[4096]{0}', space=vmem, size = 0x1000, scoped, tag = 'input window, operand 0, single buffered']
    #allocation3 [shape = 's32[1]{0}', space=sflag, size = 0x4, scoped, tag = 'scoped memory for tpu_custom_call.1']
    #allocation4 [shape = 's32[1]{0}', space=sflag, size = 0x4, scoped, tag = 'scoped memory for tpu_custom_call.1']
    #allocation5 [shape = 'u8[8192]{0}', space=vmem, size = 0x2000, scoped, tag = 'input window, operand 1, single buffered']
    #allocation6 [shape = 's32[1]{0}', space=sflag, size = 0x4, scoped, tag = 'scoped memory for tpu_custom_call.1']
    #allocation7 [shape = 'u8[32768]{0}', space=vmem, size = 0x8000, scoped, tag = 'input window, operand 3, single buffered']
    #allocation8 [shape = 'u8[32768]{0}', space=vmem, size = 0x8000, scoped, tag = 'input window, operand 5, single buffered']
    #allocation9 [shape = 's32[1]{0}', space=sflag, size = 0x4, scoped, tag = 'scoped memory for tpu_custom_call.1']
    #allocation10 [shape = 'u8[2048]{0}', space=vmem, size = 0x800, scoped, tag = 'output window, operand 0, single buffered']
    %12 = vsyncpa [#allocation3], 0
    %13 = vsyncpa [#allocation6], 0
    %14 = vsyncpa [#allocation9], 0
    %15 = vsyncpa [#allocation4], 0
    // Predicated region
    $region2: #{tpu_custom_call.1} parent=1 // pred_check
      _
    $region3: #{tpu_custom_call.1} parent=1 // pred_check_branch
      %17 = sbr.rel (0) target = $region5
    $region4: #{tpu_custom_call.1} parent=1 // pred_region
      %s19 = ssub.s32 128, 128
      %20 = vsyncadd [#allocation3], %s19
      %s22 = sshll.u32 [#allocation2], 4
      %s23 = int_to_ptr.vmem [resolvable:$true] %s22
      %25 = dma.hbm_to_vmem [thread:$0]  %s0, 128, %s23, [#allocation3]
    $region5: #{tpu_custom_call.1} parent=1 // pred_fallthru
      _
    // Predicated region
    $region6: #{tpu_custom_call.1} parent=1 // pred_check
      _
    $region7: #{tpu_custom_call.1} parent=1 // pred_check_branch
      %27 = sbr.rel (0) target = $region9
    $region8: #{tpu_custom_call.1} parent=1 // pred_region
      %s29 = ssub.s32 256, 256
      %30 = vsyncadd [#allocation6], %s29
      %s31 = sshll.u32 [#allocation5], 4
      %s32 = int_to_ptr.vmem [resolvable:$true] %s31
      %37 = dma.hbm_to_vmem [thread:$0]  %s1, 256, %s32, [#allocation6], 64, 64, 4
    $region9: #{tpu_custom_call.1} parent=1 // pred_fallthru
      _
    // Predicated region
    $region10: #{tpu_custom_call.1} parent=1 // pred_check
      _
    $region11: #{tpu_custom_call.1} parent=1 // pred_check_branch
      %39 = sbr.rel (0) target = $region13
    $region12: #{tpu_custom_call.1} parent=1 // pred_region
      _
    $region13: #{tpu_custom_call.1} parent=1 // pred_fallthru
      _
    // Predicated region
    $region14: #{tpu_custom_call.1} parent=1 // pred_check
      _
    $region15: #{tpu_custom_call.1} parent=1 // pred_check_branch
      %41 = sbr.rel (0) target = $region17
    $region16: #{tpu_custom_call.1} parent=1 // pred_region
      %s43 = ssub.s32 1024, 1024
      %44 = vsyncadd [#allocation6], %s43
      %s45 = sshll.u32 [#allocation7], 4
      %s46 = int_to_ptr.vmem [resolvable:$true] %s45
      %51 = dma.hbm_to_vmem [thread:$0]  %s3, 1024, %s46, [#allocation6], 64, 64, 4
    $region17: #{tpu_custom_call.1} parent=1 // pred_fallthru
      _
    // Predicated region
    $region18: #{tpu_custom_call.1} parent=1 // pred_check
      _
    $region19: #{tpu_custom_call.1} parent=1 // pred_check_branch
      %53 = sbr.rel (0) target = $region21
    $region20: #{tpu_custom_call.1} parent=1 // pred_region
      _
    $region21: #{tpu_custom_call.1} parent=1 // pred_fallthru
      _
    // Predicated region
    $region22: #{tpu_custom_call.1} parent=1 // pred_check
      _
    $region23: #{tpu_custom_call.1} parent=1 // pred_check_branch
      %55 = sbr.rel (0) target = $region25
    $region24: #{tpu_custom_call.1} parent=1 // pred_region
      %s57 = ssub.s32 1024, 1024
      %58 = vsyncadd [#allocation9], %s57
      %s59 = sshll.u32 [#allocation8], 4
      %s60 = int_to_ptr.vmem [resolvable:$true] %s59
      %65 = dma.hbm_to_vmem [thread:$0]  %s5, 1024, %s60, [#allocation9], 64, 64, 4
    $region25: #{tpu_custom_call.1} parent=1 // pred_fallthru
      _
    // Predicated region
    $region26: #{tpu_custom_call.1} parent=1 // pred_check
      _
    $region27: #{tpu_custom_call.1} parent=1 // pred_check_branch
      %67 = sbr.rel (0) target = $region29
    $region28: #{tpu_custom_call.1} parent=1 // pred_region
      _
    $region29: #{tpu_custom_call.1} parent=1 // pred_fallthru
      _
    // Predicated region
    $region30: #{tpu_custom_call.1} parent=1 // pred_check
      _
    $region31: #{tpu_custom_call.1} parent=1 // pred_check_branch
      %69 = sbr.rel (0) target = $region33
    $region32: #{tpu_custom_call.1} parent=1 // pred_region
      %70 = dma.done [#allocation3], 128
    $region33: #{tpu_custom_call.1} parent=1 // pred_fallthru
      _
    // Predicated region
    $region34: #{tpu_custom_call.1} parent=1 // pred_check
      _
    $region35: #{tpu_custom_call.1} parent=1 // pred_check_branch
      %72 = sbr.rel (0) target = $region37
    $region36: #{tpu_custom_call.1} parent=1 // pred_region
      %73 = dma.done [#allocation6], 256
    $region37: #{tpu_custom_call.1} parent=1 // pred_fallthru
      _
    // Predicated region
    $region38: #{tpu_custom_call.1} parent=1 // pred_check
      _
    $region39: #{tpu_custom_call.1} parent=1 // pred_check_branch
      %75 = sbr.rel (0) target = $region41
    $region40: #{tpu_custom_call.1} parent=1 // pred_region
      %76 = dma.done [#allocation6], 1024
    $region41: #{tpu_custom_call.1} parent=1 // pred_fallthru
      _
    // Predicated region
    $region42: #{tpu_custom_call.1} parent=1 // pred_check
      _
    $region43: #{tpu_custom_call.1} parent=1 // pred_check_branch
      %78 = sbr.rel (0) target = $region45
    $region44: #{tpu_custom_call.1} parent=1 // pred_region
      %79 = dma.done [#allocation9], 1024
    $region45: #{tpu_custom_call.1} parent=1 // pred_fallthru
      _
    %v81 = vld [vmem:[#allocation2] sm:$0xff]
    %v82 = vpack.c.bf16 %v81, %v81
    %v83 = vld [vmem:[#allocation5] sm:$0xf]
    %v84 = vld [vmem:[#allocation5 + $0x4] sm:$0xf]
    %v85 = vld [vmem:[#allocation5 + $0x8] sm:$0xf]
    %v86 = vld [vmem:[#allocation5 + $0xc] sm:$0xf]
    %v87 = vld [vmem:[%s2] sm:$0x1]
    %v89 = vlaneseq
    %v90 = vshrl.u32 %v89, 7
    %v91 = vsub.s32 0, %v90
    %v92 = vrot.slane %v87, %v91
    %v98 = vunpack.c.l.b16 %v83
    %v99 = vunpack.c.l.b16 %v84
    %v100 = vunpack.c.l.b16 %v85
    %v101 = vunpack.c.l.b16 %v86
    %v102 = vpack.c.b16 %v99, %v98
    %v103 = vpack.c.b16 %v101, %v100
    %vm106 = vcmask 261120
    %v108 = vsel %vm106, %v82, 0
    %110 = vmatprep.subr.bf16.mxu0 0
    %111 = vmatpush1.bf16.msra.mxu0 0
    %112 = vmatprep.subr.bf16.mxu0 0
    %113 = vmatpush1.bf16.msra.mxu0 0
    %114 = vmatprep.subr.bf16.mxu0 0
    %115 = vmatpush1.bf16.msra.mxu0 0
    %116 = vmatprep.subr.bf16.mxu0 0
    %117 = vmatpush1.bf16.msra.mxu0 0
    %118 = vmatprep.subr.bf16.mxu0 0
    %119 = vmatpush1.bf16.msra.mxu0 0
    %120 = vmatprep.subr.bf16.mxu0 0
    %121 = vmatpush1.bf16.msra.mxu0 0
    %122 = vmatprep.subr.bf16.mxu0 0
    %123 = vmatpush1.bf16.msra.mxu0 %v103
    %124 = vmatprep.subr.bf16.mxu0 0
    %125 = vmatpush1.bf16.msra.mxu0 %v102
    %126 = vmatprep.subr.bf16.mxu0 0
    %127 = vmatpush2.bf16.msra.mxu0 0
    %128 = vmatprep.subr.bf16.mxu0 0
    %129 = vmatpush2.bf16.msra.mxu0 0
    %130 = vmatprep.subr.bf16.mxu0 0
    %131 = vmatpush2.bf16.msra.mxu0 0
    %132 = vmatprep.subr.bf16.mxu0 0
    %133 = vmatpush2.bf16.msra.mxu0 0
    %134 = vmatprep.subr.bf16.mxu0 0
    %135 = vmatpush2.bf16.msra.mxu0 0
    %136 = vmatprep.subr.bf16.mxu0 0
    %137 = vmatpush2.bf16.msra.mxu0 0
    %138 = vmatprep.subr.bf16.mxu0 0
    %139 = vmatpush2.bf16.msra.mxu0 0
    %140 = vmatprep.subr.bf16.mxu0 0
    %141 = vmatpush2.bf16.msra.mxu0 0
    %142 = vmatprep.mubr.bf16.mxu0 0
    %143 = vmatmul.mubr.bf16.gmra.mxu0 %v108
    %v144 = vpop.f32.mrf.mxu0
    %v145 = vadd.f32 %v92, %v144
    %v146 = vpop.f32.mrf.mxu0
    %v147 = vpop.f32.mrf.mxu0
    %v148 = vpop.f32.mrf.mxu0
    %149 = vdwg.mxu0
    %v150 = vmax.f32 %v145, 0.0
    %v151 = vpack.c.bf16 %v150, %v150
    %v152 = vld [vmem:[#allocation7] sm:$0xf]
    %v153 = vld [vmem:[#allocation7 + $0x4] sm:$0xf]
    %v154 = vld [vmem:[#allocation7 + $0x8] sm:$0xf]
    %v155 = vld [vmem:[#allocation7 + $0xc] sm:$0xf]
    %v156 = vld [vmem:[#allocation7 + $0x10] sm:$0xf]
    %v157 = vld [vmem:[#allocation7 + $0x14] sm:$0xf]
    %v158 = vld [vmem:[#allocation7 + $0x18] sm:$0xf]
    %v159 = vld [vmem:[#allocation7 + $0x1c] sm:$0xf]
    %v160 = vld [vmem:[#allocation7 + $0x20] sm:$0xf]
    %v161 = vld [vmem:[#allocation7 + $0x24] sm:$0xf]
    %v162 = vld [vmem:[#allocation7 + $0x28] sm:$0xf]
    %v163 = vld [vmem:[#allocation7 + $0x2c] sm:$0xf]
    %v164 = vld [vmem:[#allocation7 + $0x30] sm:$0xf]
    %v165 = vld [vmem:[#allocation7 + $0x34] sm:$0xf]
    %v166 = vld [vmem:[#allocation7 + $0x38] sm:$0xf]
    %v167 = vld [vmem:[#allocation7 + $0x3c] sm:$0xf]
    %v168 = vld [vmem:[%s4] sm:$0x1]
    %v170 = vlaneseq
    %v171 = vshrl.u32 %v170, 7
    %v172 = vsub.s32 0, %v171
    %v173 = vrot.slane %v168, %v172
    %v191 = vunpack.c.l.b16 %v152
    %v192 = vunpack.c.l.b16 %v153
    %v193 = vunpack.c.l.b16 %v154
    %v194 = vunpack.c.l.b16 %v155
    %v195 = vunpack.c.l.b16 %v156
    %v196 = vunpack.c.l.b16 %v157
    %v197 = vunpack.c.l.b16 %v158
    %v198 = vunpack.c.l.b16 %v159
    %v199 = vunpack.c.l.b16 %v160
    %v200 = vunpack.c.l.b16 %v161
    %v201 = vunpack.c.l.b16 %v162
    %v202 = vunpack.c.l.b16 %v163
    %v203 = vunpack.c.l.b16 %v164
    %v204 = vunpack.c.l.b16 %v165
    %v205 = vunpack.c.l.b16 %v166
    %v206 = vunpack.c.l.b16 %v167
    %v207 = vpack.c.b16 %v192, %v191
    %v208 = vpack.c.b16 %v194, %v193
    %v209 = vpack.c.b16 %v196, %v195
    %v210 = vpack.c.b16 %v198, %v197
    %v211 = vpack.c.b16 %v200, %v199
    %v212 = vpack.c.b16 %v202, %v201
    %v213 = vpack.c.b16 %v204, %v203
    %v214 = vpack.c.b16 %v206, %v205
    %223 = vmatprep.subr.bf16.mxu0 0
    %224 = vmatpush1.bf16.msra.mxu0 %v214
    %225 = vmatprep.subr.bf16.mxu0 0
    %226 = vmatpush1.bf16.msra.mxu0 %v213
    %227 = vmatprep.subr.bf16.mxu0 0
    %228 = vmatpush1.bf16.msra.mxu0 %v212
    %229 = vmatprep.subr.bf16.mxu0 0
    %230 = vmatpush1.bf16.msra.mxu0 %v211
    %231 = vmatprep.subr.bf16.mxu0 0
    %232 = vmatpush1.bf16.msra.mxu0 %v210
    %233 = vmatprep.subr.bf16.mxu0 0
    %234 = vmatpush1.bf16.msra.mxu0 %v209
    %235 = vmatprep.subr.bf16.mxu0 0
    %236 = vmatpush1.bf16.msra.mxu0 %v208
    %237 = vmatprep.subr.bf16.mxu0 0
    %238 = vmatpush1.bf16.msra.mxu0 %v207
    %239 = vmatprep.subr.bf16.mxu0 0
    %240 = vmatpush2.bf16.msra.mxu0 0
    %241 = vmatprep.subr.bf16.mxu0 0
    %242 = vmatpush2.bf16.msra.mxu0 0
    %243 = vmatprep.subr.bf16.mxu0 0
    %244 = vmatpush2.bf16.msra.mxu0 0
    %245 = vmatprep.subr.bf16.mxu0 0
    %246 = vmatpush2.bf16.msra.mxu0 0
    %247 = vmatprep.subr.bf16.mxu0 0
    %248 = vmatpush2.bf16.msra.mxu0 0
    %249 = vmatprep.subr.bf16.mxu0 0
    %250 = vmatpush2.bf16.msra.mxu0 0
    %251 = vmatprep.subr.bf16.mxu0 0
    %252 = vmatpush2.bf16.msra.mxu0 0
    %253 = vmatprep.subr.bf16.mxu0 0
    %254 = vmatpush2.bf16.msra.mxu0 0
    %255 = vmatprep.mubr.bf16.mxu0 0
    %256 = vmatmul.mubr.bf16.gmra.mxu0 %v151
    %v257 = vpop.f32.mrf.mxu0
    %v258 = vadd.f32 %v173, %v257
    %v259 = vpop.f32.mrf.mxu0
    %v260 = vpop.f32.mrf.mxu0
    %v261 = vpop.f32.mrf.mxu0
    %262 = vdwg.mxu0
    %v263 = vmax.f32 %v258, 0.0
    %v264 = vpack.c.bf16 %v263, %v263
    %v265 = vld [vmem:[#allocation8] sm:$0xf]
    %v266 = vld [vmem:[#allocation8 + $0x4] sm:$0xf]
    %v267 = vld [vmem:[#allocation8 + $0x8] sm:$0xf]
    %v268 = vld [vmem:[#allocation8 + $0xc] sm:$0xf]
    %v269 = vld [vmem:[#allocation8 + $0x10] sm:$0xf]
    %v270 = vld [vmem:[#allocation8 + $0x14] sm:$0xf]
    %v271 = vld [vmem:[#allocation8 + $0x18] sm:$0xf]
    %v272 = vld [vmem:[#allocation8 + $0x1c] sm:$0xf]
    %v273 = vld [vmem:[#allocation8 + $0x20] sm:$0xf]
    %v274 = vld [vmem:[#allocation8 + $0x24] sm:$0xf]
    %v275 = vld [vmem:[#allocation8 + $0x28] sm:$0xf]
    %v276 = vld [vmem:[#allocation8 + $0x2c] sm:$0xf]
    %v277 = vld [vmem:[#allocation8 + $0x30] sm:$0xf]
    %v278 = vld [vmem:[#allocation8 + $0x34] sm:$0xf]
    %v279 = vld [vmem:[#allocation8 + $0x38] sm:$0xf]
    %v280 = vld [vmem:[#allocation8 + $0x3c] sm:$0xf]
    %v281 = vld [vmem:[%s6] sm:$0x1]
    %v283 = vlaneseq
    %v284 = vshrl.u32 %v283, 7
    %v285 = vsub.s32 0, %v284
    %v286 = vrot.slane %v281, %v285
    %v304 = vunpack.c.l.b16 %v265
    %v305 = vunpack.c.l.b16 %v266
    %v306 = vunpack.c.l.b16 %v267
    %v307 = vunpack.c.l.b16 %v268
    %v308 = vunpack.c.l.b16 %v269
    %v309 = vunpack.c.l.b16 %v270
    %v310 = vunpack.c.l.b16 %v271
    %v311 = vunpack.c.l.b16 %v272
    %v312 = vunpack.c.l.b16 %v273
    %v313 = vunpack.c.l.b16 %v274
    %v314 = vunpack.c.l.b16 %v275
    %v315 = vunpack.c.l.b16 %v276
    %v316 = vunpack.c.l.b16 %v277
    %v317 = vunpack.c.l.b16 %v278
    %v318 = vunpack.c.l.b16 %v279
    %v319 = vunpack.c.l.b16 %v280
    %v320 = vpack.c.b16 %v305, %v304
    %v321 = vpack.c.b16 %v307, %v306
    %v322 = vpack.c.b16 %v309, %v308
    %v323 = vpack.c.b16 %v311, %v310
    %v324 = vpack.c.b16 %v313, %v312
    %v325 = vpack.c.b16 %v315, %v314
    %v326 = vpack.c.b16 %v317, %v316
    %v327 = vpack.c.b16 %v319, %v318
    %336 = vmatprep.subr.bf16.mxu0 0
    %337 = vmatpush1.bf16.msra.mxu0 %v327
    %338 = vmatprep.subr.bf16.mxu0 0
    %339 = vmatpush1.bf16.msra.mxu0 %v326
    %340 = vmatprep.subr.bf16.mxu0 0
    %341 = vmatpush1.bf16.msra.mxu0 %v325
    %342 = vmatprep.subr.bf16.mxu0 0
    %343 = vmatpush1.bf16.msra.mxu0 %v324
    %344 = vmatprep.subr.bf16.mxu0 0
    %345 = vmatpush1.bf16.msra.mxu0 %v323
    %346 = vmatprep.subr.bf16.mxu0 0
    %347 = vmatpush1.bf16.msra.mxu0 %v322
    %348 = vmatprep.subr.bf16.mxu0 0
    %349 = vmatpush1.bf16.msra.mxu0 %v321
    %350 = vmatprep.subr.bf16.mxu0 0
    %351 = vmatpush1.bf16.msra.mxu0 %v320
    %352 = vmatprep.subr.bf16.mxu0 0
    %353 = vmatpush2.bf16.msra.mxu0 0
    %354 = vmatprep.subr.bf16.mxu0 0
    %355 = vmatpush2.bf16.msra.mxu0 0
    %356 = vmatprep.subr.bf16.mxu0 0
    %357 = vmatpush2.bf16.msra.mxu0 0
    %358 = vmatprep.subr.bf16.mxu0 0
    %359 = vmatpush2.bf16.msra.mxu0 0
    %360 = vmatprep.subr.bf16.mxu0 0
    %361 = vmatpush2.bf16.msra.mxu0 0
    %362 = vmatprep.subr.bf16.mxu0 0
    %363 = vmatpush2.bf16.msra.mxu0 0
    %364 = vmatprep.subr.bf16.mxu0 0
    %365 = vmatpush2.bf16.msra.mxu0 0
    %366 = vmatprep.subr.bf16.mxu0 0
    %367 = vmatpush2.bf16.msra.mxu0 0
    %368 = vmatprep.mubr.bf16.mxu0 0
    %369 = vmatmul.mubr.bf16.gmra.mxu0 %v264
    %v370 = vpop.f32.mrf.mxu0
    %v371 = vadd.f32 %v286, %v370
    %v372 = vpop.f32.mrf.mxu0
    %v373 = vpop.f32.mrf.mxu0
    %v374 = vpop.f32.mrf.mxu0
    %375 = vdwg.mxu0
    %v376 = vlaneseq
    %v377 = vand.u32 %v376, 127
    %vm378 = vcmp.lt.s32.totalorder %v377, 6
    %v379 = vsel %vm378, %v371, -inf
    %380 = vmax.xlane.f32.xlu0 %v379
    %v381 = vpop.xlane.xlu0 %380
    %v382 = vsub.f32 %v371, %v381
    %v383 = vmul.f32 %v382, 1.442695
    %v384 = vpow.pop %v383
    %v385 = vsel %vm378, %v384, 0.0
    %386 = vadd.xlane.f32.xlu0 %v385
    %v387 = vpop.xlane.xlu0 %386
    %v388 = vlog2.pop %v387
    %v389 = vmul.f32 %v388, 0.6931472
    %v390 = vsub.f32 %v382, %v389
    %v391 = vmul.f32 %v385, %v382
    %392 = vadd.xlane.f32.xlu0 %v391
    %v393 = vpop.xlane.xlu0 %392
    %v394 = vrcp.pop %v387
    %v395 = vmul.f32 %v393, %v394
    %v396 = vsub.f32 %v389, %v395
    %vm397 = vcmp.eq.s32.totalorder %v377, 6
    %v398 = vsel %vm397, %v371, 0.0
    %399 = vadd.xlane.f32.xlu0 %v398
    %v400 = vpop.xlane.xlu0 %399
    %vm401 = vcmp.eq.s32.totalorder %v377, 7
    %v402 = vsel %vm401, %v396, 0.0
    %v403 = vsel %vm397, %v400, %v402
    %v404 = vsel %vm378, %v390, %v403
    %v405 = vpack.c.bf16 %v404, %v404
    %406 = vst [vmem:[#allocation10] sm:$0xf] %v405
    // Predicated region
    $region46: #{tpu_custom_call.1} parent=1 // pred_check
      _
    $region47: #{tpu_custom_call.1} parent=1 // pred_check_branch
      %408 = sbr.rel (0) target = $region49
    $region48: #{tpu_custom_call.1} parent=1 // pred_region
      %s410 = ssub.s32 64, 64
      %411 = vsyncadd [#allocation4], %s410
      %s413 = sshll.u32 [#allocation10], 4
      %s414 = int_to_ptr.vmem [resolvable:$true] %s413
      %416 = dma.vmem_to_hbm [thread:$0]  %s414, 64, %s7, [#allocation4]
    $region49: #{tpu_custom_call.1} parent=1 // pred_fallthru
      _
    // Predicated region
    $region50: #{tpu_custom_call.1} parent=1 // pred_check
      _
    $region51: #{tpu_custom_call.1} parent=1 // pred_check_branch
      %418 = sbr.rel (0) target = $region53
    $region52: #{tpu_custom_call.1} parent=1 // pred_region
      %419 = dma.done [#allocation4], 64
    $region53: #{tpu_custom_call.1} parent=1 // pred_fallthru
      _
    %420 = vsyncpa [#allocation3], 1
    %421 = vsyncpa [#allocation6], 1
    %422 = vsyncpa [#allocation9], 1
    %423 = vsyncpa [#allocation4], 1

</llo_original>
